<compile_context>
chip_gen: v5e
topology: v5e:2x2
jax: 0.10.0
libtpu: 0.0.40
codegen_flags: <defaults>
</compile_context>

<pallas_src>
import jax
import jax.numpy as jnp
from jax.experimental import pallas as pl
from jax.experimental.pallas import tpu as pltpu

IN_FEATURES = 28 * 28        # 784 (PyTorch fc1 in_features)
HIDDEN = 128
OUT_FEATURES = 10            # PyTorch fc2 out_features
OUT_PAD = 128                # lane-dense output width (unmasked stores)
MAX_TB = 2048                # max batch-tile rows per grid step
MIN_STEPS = 6                # prefer >= 3 grid steps per TensorCore on v7x


def _round_up(n, m):
    return ((n + m - 1) // m) * m


def _choose_tb(batch):
    """Rows per grid step.

    Small batches: a single tile rounded to the 8-row sublane granule.
    Large batches: multiples of 256 (MXU-row / bf16 sublane-packing friendly),
    capped at MAX_TB, distributing rows over the minimum tile count (bounds
    tail-padding waste) while aiming for >= MIN_STEPS steps so v7x's two
    TensorCores each get several steps of pipelined overlap.
    """
    if batch <= 256:
        return _round_up(max(batch, 1), 8)
    n_tiles = max(pl.cdiv(batch, MAX_TB), min(MIN_STEPS, batch // 256))
    return min(MAX_TB, _round_up(pl.cdiv(batch, n_tiles), 256))


def mlp_kernel(x_ref, w1_ref, b1_ref, w2_ref, b2_ref, o_ref):
    # x arrives in its native dtype (f32 typically); cast on-chip for the MXU.
    x = x_ref[...].astype(jnp.bfloat16)
    # fc1: bf16 operands on the MXU, f32 accumulation.
    h = jnp.dot(x, w1_ref[...], preferred_element_type=jnp.float32)
    # bias + ReLU epilogue in f32 on the VPU (v5e has no bf16 VALU).
    h = jnp.maximum(h + b1_ref[...], 0.0)
    # fc2: cast activations back to bf16 for the MXU, f32 accumulation.
    y = jnp.dot(h.astype(jnp.bfloat16), w2_ref[...],
                preferred_element_type=jnp.float32)
    # bf16 writeback (lane-dense 128 wide) halves output HBM traffic.
    o_ref[...] = (y + b2_ref[...]).astype(o_ref.dtype)


def simple_nn_forward(x, w1, b1, w2, b2):
    """Mirrors SimpleNN.forward.

    x : (..., 28, 28) or (B, 784), any float dtype.
    w1: (784, 128)  b1: (128,)   (weights stored transposed vs PyTorch)
    w2: (128, 10)   b2: (10,)
    returns (B, 10) float32.
    """
    x2d = x.reshape(-1, IN_FEATURES)                     # torch x.view(-1, 784)
    B = x2d.shape[0]

    TB = _choose_tb(B)
    grid_b = pl.cdiv(B, TB)
    B_pad = grid_b * TB

    # Tail rows only, native dtype, native K=784 -- no full re-write of x when
    # the batch already divides the tile size.
    if B_pad != B:
        x2d = jnp.pad(x2d, ((0, B_pad - B), (0, 0)))

    # Weights are tiny and VMEM-resident: bf16 operands, f32 biases.
    w1_b = w1.astype(jnp.bfloat16)                       # (784, 128)
    b1_b = b1.reshape(1, HIDDEN).astype(jnp.float32)     # (1, 128)

    w2_p = jnp.zeros((HIDDEN, OUT_PAD), jnp.bfloat16)
    w2_p = w2_p.at[:, :OUT_FEATURES].set(w2.astype(jnp.bfloat16))
    b2_p = jnp.zeros((1, OUT_PAD), jnp.float32)
    b2_p = b2_p.at[0, :OUT_FEATURES].set(b2.astype(jnp.float32))

    out_padded = pl.pallas_call(
        mlp_kernel,
        out_shape=jax.ShapeDtypeStruct((B_pad, OUT_PAD), jnp.bfloat16),
        grid=(grid_b,),
        in_specs=[
            # x streamed per tile, native dtype, full K (784 == full array dim).
            pl.BlockSpec((TB, IN_FEATURES), lambda i: (i, 0)),
            pl.BlockSpec((IN_FEATURES, HIDDEN), lambda i: (0, 0)),  # w1 resident
            pl.BlockSpec((1, HIDDEN), lambda i: (0, 0)),            # b1 resident
            pl.BlockSpec((HIDDEN, OUT_PAD), lambda i: (0, 0)),      # w2 resident
            pl.BlockSpec((1, OUT_PAD), lambda i: (0, 0)),           # b2 resident
        ],
        out_specs=pl.BlockSpec((TB, OUT_PAD), lambda i: (i, 0)),
        compiler_params=pltpu.CompilerParams(
            dimension_semantics=("parallel",),   # v7x dual-TC grid sharding
            # Fits double-buffered (2048, 784) f32 x tiles + temps on v5e's
            # 16 MiB scoped default; still < v7x's 64 MiB physical VMEM.
            vmem_limit_bytes=48 * 1024 * 1024,
        ),
    )(x2d, w1_b, b1_b, w2_p, b2_p)

    # Slice padding back off and return f32 like the PyTorch reference.
    return out_padded[:B, :OUT_FEATURES].astype(jnp.float32)


def init_params(key):
    """PyTorch nn.Linear default init, weights stored as (in, out)."""
    k1, k2, k3, k4 = jax.random.split(key, 4)
    bound1 = 1.0 / jnp.sqrt(IN_FEATURES)
    bound2 = 1.0 / jnp.sqrt(HIDDEN)
    w1 = jax.random.uniform(k1, (IN_FEATURES, HIDDEN), jnp.float32, -bound1, bound1)
    b1 = jax.random.uniform(k2, (HIDDEN,), jnp.float32, -bound1, bound1)
    w2 = jax.random.uniform(k3, (HIDDEN, OUT_FEATURES), jnp.float32, -bound2, bound2)
    b2 = jax.random.uniform(k4, (OUT_FEATURES,), jnp.float32, -bound2, bound2)
    return w1, b1, w2, b2


if __name__ == "__main__":
    key = jax.random.PRNGKey(0)
    kx, kp = jax.random.split(key)

    batch = 2
    # MNIST-style input: (B, 1, 28, 28), flattened inside forward.
    x = jax.random.normal(kx, (batch, 1, 28, 28), jnp.float32)
    w1, b1, w2, b2 = init_params(kp)

    out = simple_nn_forward(x, w1, b1, w2, b2)
    out = jax.block_until_ready(out)

    # Reference in plain JAX emulating the same bf16 operand casts + f32 accum.
    # NOTE: bf16 MXU operands deviate slightly from the full-f32 PyTorch module;
    # tolerance below reflects that (values are O(1), bf16 rel. err ~2^-9).
    x2d = x.reshape(-1, IN_FEATURES).astype(jnp.bfloat16).astype(jnp.float32)
    w1f = w1.astype(jnp.bfloat16).astype(jnp.float32)
    w2f = w2.astype(jnp.bfloat16).astype(jnp.float32)
    h_ref = jnp.maximum(x2d @ w1f + b1[None, :], 0.0)
    ref = h_ref.astype(jnp.bfloat16).astype(jnp.float32) @ w2f + b2[None, :]

    assert out.shape == (batch, OUT_FEATURES)
    assert jnp.allclose(out, ref, atol=2e-2, rtol=2e-2)

    print("KERNEL_OK")
</pallas_src>

<mosaic_0001>
module attributes {stable_mosaic.version = 11 : i64} {
  func.func @mlp_kernel(%arg0: i32, %arg1: memref<8x784xf32, #tpu.memory_space<vmem>>, %arg2: memref<784x128xbf16, #tpu.memory_space<vmem>>, %arg3: memref<1x128xf32, #tpu.memory_space<vmem>>, %arg4: memref<128x128xbf16, #tpu.memory_space<vmem>>, %arg5: memref<1x128xf32, #tpu.memory_space<vmem>>, %arg6: memref<8x128xbf16, #tpu.memory_space<vmem>>) attributes {dimension_semantics = [#tpu.dimension_semantics<parallel>], iteration_bounds = array<i64: 1>, scalar_prefetch = 0 : i64, scratch_operands = 0 : i64, tpu.core_type = #tpu.core_type<tc>, window_params = [{transform_indices = @transform_0, window_bounds = array<i64: 8, 784>}, {pipeline_mode = #tpu.pipeline_mode<synchronous>, transform_indices = @transform_1, window_bounds = array<i64: 784, 128>}, {pipeline_mode = #tpu.pipeline_mode<synchronous>, transform_indices = @transform_2, window_bounds = array<i64: 1, 128>}, {pipeline_mode = #tpu.pipeline_mode<synchronous>, transform_indices = @transform_3, window_bounds = array<i64: 128, 128>}, {pipeline_mode = #tpu.pipeline_mode<synchronous>, transform_indices = @transform_4, window_bounds = array<i64: 1, 128>}, {transform_indices = @transform_5, window_bounds = array<i64: 8, 128>}]} {
    %c0 = arith.constant 0 : index
    %c0_0 = arith.constant 0 : index
    %0 = vector.load %arg1[%c0, %c0_0] : memref<8x784xf32, #tpu.memory_space<vmem>>, vector<8x784xf32>
    %1 = arith.truncf %0 : vector<8x784xf32> to vector<8x784xbf16>
    %c0_1 = arith.constant 0 : index
    %c0_2 = arith.constant 0 : index
    %2 = vector.load %arg2[%c0_1, %c0_2] : memref<784x128xbf16, #tpu.memory_space<vmem>>, vector<784x128xbf16>
    %cst = arith.constant dense<0.000000e+00> : vector<8x128xf32>
    %3 = tpu.matmul %1, %2, %cst {dimension_numbers = #tpu.dot_dimension_numbers<[1], [0], [0], [1], [0, 0, 1, 1], [], []>} : vector<8x784xbf16>, vector<784x128xbf16>, vector<8x128xf32> -> vector<8x128xf32>
    %c0_3 = arith.constant 0 : index
    %c0_4 = arith.constant 0 : index
    %4 = vector.load %arg3[%c0_3, %c0_4] : memref<1x128xf32, #tpu.memory_space<vmem>>, vector<1x128xf32>
    %5 = vector.broadcast %4 : vector<1x128xf32> to vector<8x128xf32>
    %6 = arith.addf %3, %5 : vector<8x128xf32>
    %cst_5 = arith.constant 0.000000e+00 : f32
    %7 = vector.broadcast %cst_5 : f32 to vector<8x128xf32>
    %8 = arith.maximumf %6, %7 : vector<8x128xf32>
    %9 = arith.truncf %8 : vector<8x128xf32> to vector<8x128xbf16>
    %c0_6 = arith.constant 0 : index
    %c0_7 = arith.constant 0 : index
    %10 = vector.load %arg4[%c0_6, %c0_7] : memref<128x128xbf16, #tpu.memory_space<vmem>>, vector<128x128xbf16>
    %cst_8 = arith.constant dense<0.000000e+00> : vector<8x128xf32>
    %11 = tpu.matmul %9, %10, %cst_8 {dimension_numbers = #tpu.dot_dimension_numbers<[1], [0], [0], [1], [0, 0, 1, 1], [], []>} : vector<8x128xbf16>, vector<128x128xbf16>, vector<8x128xf32> -> vector<8x128xf32>
    %c0_9 = arith.constant 0 : index
    %c0_10 = arith.constant 0 : index
    %12 = vector.load %arg5[%c0_9, %c0_10] : memref<1x128xf32, #tpu.memory_space<vmem>>, vector<1x128xf32>
    %13 = vector.broadcast %12 : vector<1x128xf32> to vector<8x128xf32>
    %14 = arith.addf %11, %13 : vector<8x128xf32>
    %15 = arith.truncf %14 : vector<8x128xf32> to vector<8x128xbf16>
    %c0_11 = arith.constant 0 : index
    %c0_12 = arith.constant 0 : index
    %16 = vector.load %arg6[%c0_11, %c0_12] : memref<8x128xbf16, #tpu.memory_space<vmem>>, vector<8x128xbf16>
    tpu.vector_store %arg6[%c0_11, %c0_12], %15 {strides = array<i32>} : memref<8x128xbf16, #tpu.memory_space<vmem>>, vector<8x128xbf16>,
    return
  }
  func.func @transform_0(%arg0: i32) -> (i32, i32) {
    %c0_i32 = arith.constant 0 : i32
    %c0_i32_0 = arith.constant 0 : i32
    return %arg0, %c0_i32 : i32, i32
  }
  func.func @transform_1(%arg0: i32) -> (i32, i32) {
    %c0_i32 = arith.constant 0 : i32
    %c0_i32_0 = arith.constant 0 : i32
    %c0_i32_1 = arith.constant 0 : i32
    return %c0_i32, %c0_i32_0 : i32, i32
  }
  func.func @transform_2(%arg0: i32) -> (i32, i32) {
    %c0_i32 = arith.constant 0 : i32
    %c0_i32_0 = arith.constant 0 : i32
    %c0_i32_1 = arith.constant 0 : i32
    return %c0_i32, %c0_i32_0 : i32, i32
  }
  func.func @transform_3(%arg0: i32) -> (i32, i32) {
    %c0_i32 = arith.constant 0 : i32
    %c0_i32_0 = arith.constant 0 : i32
    %c0_i32_1 = arith.constant 0 : i32
    return %c0_i32, %c0_i32_0 : i32, i32
  }
  func.func @transform_4(%arg0: i32) -> (i32, i32) {
    %c0_i32 = arith.constant 0 : i32
    %c0_i32_0 = arith.constant 0 : i32
    %c0_i32_1 = arith.constant 0 : i32
    return %c0_i32, %c0_i32_0 : i32, i32
  }
  func.func @transform_5(%arg0: i32) -> (i32, i32) {
    %c0_i32 = arith.constant 0 : i32
    %c0_i32_0 = arith.constant 0 : i32
    return %arg0, %c0_i32 : i32, i32
  }
}

</mosaic_0001>

<llo_original>
// kernel: tpu_custom_call.1
$region0: #{tpu_custom_call.1}
  #allocation0 [shape = 'u32[]', space=smem, size = 0x4, offset = 0x4, fixed_abs, tag = 'smem constant byte address 0x4 - core index']
  #allocation1 [shape = 'u32[72,128]{1,0:T(1,128)}', space=vmem, size = 0x9000, scoped, tag = 'internal scratch']
  %s0 = inlined_call_operand.hbm [shape: f32[8,784], index: 0, kind: input, shape index: {}]
  %s1 = inlined_call_operand.hbm [shape: bf16[784,128], index: 1, kind: input, shape index: {}]
  %s2 = inlined_call_operand.vmem [shape: f32[1,128], index: 2, kind: input, shape index: {}]
  %s3 = inlined_call_operand.hbm [shape: bf16[128,128], index: 3, kind: input, shape index: {}]
  %s4 = inlined_call_operand.vmem [shape: f32[1,128], index: 4, kind: input, shape index: {}]
  %s5 = inlined_call_operand.hbm [shape: bf16[8,128], index: 5, kind: output, shape index: {}]
  %s6 = sld [smem:[#allocation0]]
  $region42: #{tpu_custom_call.1} parent=0
    _
  %s8 = ssub.s32 1, %s6
  %s9 = scalar_select 0, %s8, %s6
  $region1: #{tpu_custom_call.1} parent=0
    #allocation2 [shape = 'u8[28672]{0}', space=vmem, size = 0x7000, scoped, tag = 'input window, operand 0, single buffered']
    #allocation3 [shape = 's32[1]{0}', space=sflag, size = 0x4, scoped, tag = 'scoped memory for tpu_custom_call.1']
    #allocation4 [shape = 's32[1]{0}', space=sflag, size = 0x4, scoped, tag = 'scoped memory for tpu_custom_call.1']
    #allocation5 [shape = 'u8[200704]{0}', space=vmem, size = 0x31000, scoped, tag = 'input window, operand 1, single buffered']
    #allocation6 [shape = 's32[1]{0}', space=sflag, size = 0x4, scoped, tag = 'scoped memory for tpu_custom_call.1']
    #allocation7 [shape = 'u8[32768]{0}', space=vmem, size = 0x8000, scoped, tag = 'input window, operand 3, single buffered']
    #allocation8 [shape = 'u8[2048]{0}', space=vmem, size = 0x800, scoped, tag = 'output window, operand 0, single buffered']
    %10 = vsyncpa [#allocation3], 0
    %11 = vsyncpa [#allocation6], 0
    %12 = vsyncpa [#allocation4], 0
    // Predicated region
    $region2: #{tpu_custom_call.1} parent=1 // pred_check
      _
    $region3: #{tpu_custom_call.1} parent=1 // pred_check_branch
      %14 = sbr.rel (0) target = $region5
    $region4: #{tpu_custom_call.1} parent=1 // pred_region
      %16 = vsyncadd [#allocation3], 0
      %s18 = sshll.u32 %s0, 4
      %s19 = int_to_ptr.hbm [resolvable:$true] %s18
      %s20 = sshll.u32 [#allocation2], 4
      %s21 = int_to_ptr.vmem [resolvable:$true] %s20
      %23 = dma.hbm_to_vmem [thread:$0]  %s19, 896, %s21, [#allocation3]
    $region5: #{tpu_custom_call.1} parent=1 // pred_fallthru
      _
    // Predicated region
    $region6: #{tpu_custom_call.1} parent=1 // pred_check
      _
    $region7: #{tpu_custom_call.1} parent=1 // pred_check_branch
      %25 = sbr.rel (0) target = $region9
    $region8: #{tpu_custom_call.1} parent=1 // pred_region
      %27 = vsyncadd [#allocation6], 0
      %s28 = sshll.u32 %s1, 4
      %s29 = int_to_ptr.hbm [resolvable:$true] %s28
      %s30 = sshll.u32 [#allocation5], 4
      %s31 = int_to_ptr.vmem [resolvable:$true] %s30
      %36 = dma.hbm_to_vmem [thread:$0]  %s29, 6272, %s31, [#allocation6], 64, 64, 4
    $region9: #{tpu_custom_call.1} parent=1 // pred_fallthru
      _
    // Predicated region
    $region10: #{tpu_custom_call.1} parent=1 // pred_check
      _
    $region11: #{tpu_custom_call.1} parent=1 // pred_check_branch
      %38 = sbr.rel (0) target = $region13
    $region12: #{tpu_custom_call.1} parent=1 // pred_region
      _
    $region13: #{tpu_custom_call.1} parent=1 // pred_fallthru
      _
    // Predicated region
    $region14: #{tpu_custom_call.1} parent=1 // pred_check
      _
    $region15: #{tpu_custom_call.1} parent=1 // pred_check_branch
      %40 = sbr.rel (0) target = $region17
    $region16: #{tpu_custom_call.1} parent=1 // pred_region
      %42 = vsyncadd [#allocation6], 0
      %s43 = sshll.u32 %s3, 4
      %s44 = int_to_ptr.hbm [resolvable:$true] %s43
      %s45 = sshll.u32 [#allocation7], 4
      %s46 = int_to_ptr.vmem [resolvable:$true] %s45
      %51 = dma.hbm_to_vmem [thread:$0]  %s44, 1024, %s46, [#allocation6], 64, 64, 4
    $region17: #{tpu_custom_call.1} parent=1 // pred_fallthru
      _
    // Predicated region
    $region18: #{tpu_custom_call.1} parent=1 // pred_check
      _
    $region19: #{tpu_custom_call.1} parent=1 // pred_check_branch
      %53 = sbr.rel (0) target = $region21
    $region20: #{tpu_custom_call.1} parent=1 // pred_region
      _
    $region21: #{tpu_custom_call.1} parent=1 // pred_fallthru
      _
    // Predicated region
    $region22: #{tpu_custom_call.1} parent=1 // pred_check
      _
    $region23: #{tpu_custom_call.1} parent=1 // pred_check_branch
      %55 = sbr.rel (0) target = $region25
    $region24: #{tpu_custom_call.1} parent=1 // pred_region
      %57 = dma.done [#allocation3], 896
    $region25: #{tpu_custom_call.1} parent=1 // pred_fallthru
      _
    // Predicated region
    $region26: #{tpu_custom_call.1} parent=1 // pred_check
      _
    $region27: #{tpu_custom_call.1} parent=1 // pred_check_branch
      %59 = sbr.rel (0) target = $region29
    $region28: #{tpu_custom_call.1} parent=1 // pred_region
      %61 = dma.done [#allocation6], 6272
    $region29: #{tpu_custom_call.1} parent=1 // pred_fallthru
      _
    // Predicated region
    $region30: #{tpu_custom_call.1} parent=1 // pred_check
      _
    $region31: #{tpu_custom_call.1} parent=1 // pred_check_branch
      %63 = sbr.rel (0) target = $region33
    $region32: #{tpu_custom_call.1} parent=1 // pred_region
      %65 = dma.done [#allocation6], 1024
    $region33: #{tpu_custom_call.1} parent=1 // pred_fallthru
      _
    %v67 = vld [vmem:[#allocation2] sm:$0xff]
    %v68 = vld [vmem:[#allocation2 + $0x8] sm:$0xff]
    %v69 = vld [vmem:[#allocation2 + $0x10] sm:$0xff]
    %v70 = vld [vmem:[#allocation2 + $0x18] sm:$0xff]
    %v71 = vld [vmem:[#allocation2 + $0x20] sm:$0xff]
    %v72 = vld [vmem:[#allocation2 + $0x28] sm:$0xff]
    %v73 = vld [vmem:[#allocation2 + $0x30] sm:$0xff]
    %v74 = vpack.c.bf16 %v67, %v67
    %v75 = vpack.c.bf16 %v68, %v68
    %v76 = vpack.c.bf16 %v69, %v69
    %v77 = vpack.c.bf16 %v70, %v70
    %v78 = vpack.c.bf16 %v71, %v71
    %v79 = vpack.c.bf16 %v72, %v72
    %v80 = vpack.c.bf16 %v73, %v73
    %v81 = vld [vmem:[#allocation5] sm:$0xf]
    %v82 = vld [vmem:[#allocation5 + $0x4] sm:$0xf]
    %v83 = vld [vmem:[#allocation5 + $0x8] sm:$0xf]
    %v84 = vld [vmem:[#allocation5 + $0xc] sm:$0xf]
    %v85 = vld [vmem:[#allocation5 + $0x10] sm:$0xf]
    %v86 = vld [vmem:[#allocation5 + $0x14] sm:$0xf]
    %v87 = vld [vmem:[#allocation5 + $0x18] sm:$0xf]
    %v88 = vld [vmem:[#allocation5 + $0x1c] sm:$0xf]
    %v89 = vld [vmem:[#allocation5 + $0x20] sm:$0xf]
    %v90 = vld [vmem:[#allocation5 + $0x24] sm:$0xf]
    %v91 = vld [vmem:[#allocation5 + $0x28] sm:$0xf]
    %v92 = vld [vmem:[#allocation5 + $0x2c] sm:$0xf]
    %v93 = vld [vmem:[#allocation5 + $0x30] sm:$0xf]
    %v94 = vld [vmem:[#allocation5 + $0x34] sm:$0xf]
    %v95 = vld [vmem:[#allocation5 + $0x38] sm:$0xf]
    %v96 = vld [vmem:[#allocation5 + $0x3c] sm:$0xf]
    %v97 = vld [vmem:[#allocation5 + $0x40] sm:$0xf]
    %v98 = vld [vmem:[#allocation5 + $0x44] sm:$0xf]
    %v99 = vld [vmem:[#allocation5 + $0x48] sm:$0xf]
    %v100 = vld [vmem:[#allocation5 + $0x4c] sm:$0xf]
    %v101 = vld [vmem:[#allocation5 + $0x50] sm:$0xf]
    %v102 = vld [vmem:[#allocation5 + $0x54] sm:$0xf]
    %v103 = vld [vmem:[#allocation5 + $0x58] sm:$0xf]
    %v104 = vld [vmem:[#allocation5 + $0x5c] sm:$0xf]
    %v105 = vld [vmem:[#allocation5 + $0x60] sm:$0xf]
    %v106 = vld [vmem:[#allocation5 + $0x64] sm:$0xf]
    %v107 = vld [vmem:[#allocation5 + $0x68] sm:$0xf]
    %v108 = vld [vmem:[#allocation5 + $0x6c] sm:$0xf]
    %v109 = vld [vmem:[#allocation5 + $0x70] sm:$0xf]
    %v110 = vld [vmem:[#allocation5 + $0x74] sm:$0xf]
    %v111 = vld [vmem:[#allocation5 + $0x78] sm:$0xf]
    %v112 = vld [vmem:[#allocation5 + $0x7c] sm:$0xf]
    %v113 = vld [vmem:[#allocation5 + $0x80] sm:$0xf]
    %v114 = vld [vmem:[#allocation5 + $0x84] sm:$0xf]
    %v115 = vld [vmem:[#allocation5 + $0x88] sm:$0xf]
    %v116 = vld [vmem:[#allocation5 + $0x8c] sm:$0xf]
    %v117 = vld [vmem:[#allocation5 + $0x90] sm:$0xf]
    %v118 = vld [vmem:[#allocation5 + $0x94] sm:$0xf]
    %v119 = vld [vmem:[#allocation5 + $0x98] sm:$0xf]
    %v120 = vld [vmem:[#allocation5 + $0x9c] sm:$0xf]
    %v121 = vld [vmem:[#allocation5 + $0xa0] sm:$0xf]
    %v122 = vld [vmem:[#allocation5 + $0xa4] sm:$0xf]
    %v123 = vld [vmem:[#allocation5 + $0xa8] sm:$0xf]
    %v124 = vld [vmem:[#allocation5 + $0xac] sm:$0xf]
    %v125 = vld [vmem:[#allocation5 + $0xb0] sm:$0xf]
    %v126 = vld [vmem:[#allocation5 + $0xb4] sm:$0xf]
    %v127 = vld [vmem:[#allocation5 + $0xb8] sm:$0xf]
    %v128 = vld [vmem:[#allocation5 + $0xbc] sm:$0xf]
    %v129 = vld [vmem:[#allocation5 + $0xc0] sm:$0xf]
    %v130 = vld [vmem:[#allocation5 + $0xc4] sm:$0xf]
    %v131 = vld [vmem:[#allocation5 + $0xc8] sm:$0xf]
    %v132 = vld [vmem:[#allocation5 + $0xcc] sm:$0xf]
    %v133 = vld [vmem:[#allocation5 + $0xd0] sm:$0xf]
    %v134 = vld [vmem:[#allocation5 + $0xd4] sm:$0xf]
    %v135 = vld [vmem:[#allocation5 + $0xd8] sm:$0xf]
    %v136 = vld [vmem:[#allocation5 + $0xdc] sm:$0xf]
    %v137 = vld [vmem:[#allocation5 + $0xe0] sm:$0xf]
    %v138 = vld [vmem:[#allocation5 + $0xe4] sm:$0xf]
    %v139 = vld [vmem:[#allocation5 + $0xe8] sm:$0xf]
    %v140 = vld [vmem:[#allocation5 + $0xec] sm:$0xf]
    %v141 = vld [vmem:[#allocation5 + $0xf0] sm:$0xf]
    %v142 = vld [vmem:[#allocation5 + $0xf4] sm:$0xf]
    %v143 = vld [vmem:[#allocation5 + $0xf8] sm:$0xf]
    %v144 = vld [vmem:[#allocation5 + $0xfc] sm:$0xf]
    %v145 = vld [vmem:[#allocation5 + $0x100] sm:$0xf]
    %v146 = vld [vmem:[#allocation5 + $0x104] sm:$0xf]
    %v147 = vld [vmem:[#allocation5 + $0x108] sm:$0xf]
    %v148 = vld [vmem:[#allocation5 + $0x10c] sm:$0xf]
    %v149 = vld [vmem:[#allocation5 + $0x110] sm:$0xf]
    %v150 = vld [vmem:[#allocation5 + $0x114] sm:$0xf]
    %v151 = vld [vmem:[#allocation5 + $0x118] sm:$0xf]
    %v152 = vld [vmem:[#allocation5 + $0x11c] sm:$0xf]
    %v153 = vld [vmem:[#allocation5 + $0x120] sm:$0xf]
    %v154 = vld [vmem:[#allocation5 + $0x124] sm:$0xf]
    %v155 = vld [vmem:[#allocation5 + $0x128] sm:$0xf]
    %v156 = vld [vmem:[#allocation5 + $0x12c] sm:$0xf]
    %v157 = vld [vmem:[#allocation5 + $0x130] sm:$0xf]
    %v158 = vld [vmem:[#allocation5 + $0x134] sm:$0xf]
    %v159 = vld [vmem:[#allocation5 + $0x138] sm:$0xf]
    %v160 = vld [vmem:[#allocation5 + $0x13c] sm:$0xf]
    %v161 = vld [vmem:[#allocation5 + $0x140] sm:$0xf]
    %v162 = vld [vmem:[#allocation5 + $0x144] sm:$0xf]
    %v163 = vld [vmem:[#allocation5 + $0x148] sm:$0xf]
    %v164 = vld [vmem:[#allocation5 + $0x14c] sm:$0xf]
    %v165 = vld [vmem:[#allocation5 + $0x150] sm:$0xf]
    %v166 = vld [vmem:[#allocation5 + $0x154] sm:$0xf]
    %v167 = vld [vmem:[#allocation5 + $0x158] sm:$0xf]
    %v168 = vld [vmem:[#allocation5 + $0x15c] sm:$0xf]
    %v169 = vld [vmem:[#allocation5 + $0x160] sm:$0xf]
    %v170 = vld [vmem:[#allocation5 + $0x164] sm:$0xf]
    %v171 = vld [vmem:[#allocation5 + $0x168] sm:$0xf]
    %v172 = vld [vmem:[#allocation5 + $0x16c] sm:$0xf]
    %v173 = vld [vmem:[#allocation5 + $0x170] sm:$0xf]
    %v174 = vld [vmem:[#allocation5 + $0x174] sm:$0xf]
    %v175 = vld [vmem:[#allocation5 + $0x178] sm:$0xf]
    %v176 = vld [vmem:[#allocation5 + $0x17c] sm:$0xf]
    %v177 = vld [vmem:[#allocation5 + $0x180] sm:$0xf]
    %v178 = vld [vmem:[#allocation5 + $0x184] sm:$0xf]
    %v179 = vld [vmem:[%s2] sm:$0x1]
    %v181 = vperm.slane %v179, 0
    %v281 = vunpack.c.l.b16 %v81
    %v282 = vunpack.c.l.b16 %v82
    %v283 = vunpack.c.l.b16 %v83
    %v284 = vunpack.c.l.b16 %v84
    %v285 = vunpack.c.l.b16 %v85
    %v286 = vunpack.c.l.b16 %v86
    %v287 = vunpack.c.l.b16 %v87
    %v288 = vunpack.c.l.b16 %v88
    %v289 = vunpack.c.l.b16 %v89
    %v290 = vunpack.c.l.b16 %v90
    %v291 = vunpack.c.l.b16 %v91
    %v292 = vunpack.c.l.b16 %v92
    %v293 = vunpack.c.l.b16 %v93
    %v294 = vunpack.c.l.b16 %v94
    %v295 = vunpack.c.l.b16 %v95
    %v296 = vunpack.c.l.b16 %v96
    %v297 = vunpack.c.l.b16 %v97
    %v298 = vunpack.c.l.b16 %v98
    %v299 = vunpack.c.l.b16 %v99
    %v300 = vunpack.c.l.b16 %v100
    %v301 = vunpack.c.l.b16 %v101
    %v302 = vunpack.c.l.b16 %v102
    %v303 = vunpack.c.l.b16 %v103
    %v304 = vunpack.c.l.b16 %v104
    %v305 = vunpack.c.l.b16 %v105
    %v306 = vunpack.c.l.b16 %v106
    %v307 = vunpack.c.l.b16 %v107
    %v308 = vunpack.c.l.b16 %v108
    %v309 = vunpack.c.l.b16 %v109
    %v310 = vunpack.c.l.b16 %v110
    %v311 = vunpack.c.l.b16 %v111
    %v312 = vunpack.c.l.b16 %v112
    %v313 = vunpack.c.l.b16 %v113
    %v314 = vunpack.c.l.b16 %v114
    %v315 = vunpack.c.l.b16 %v115
    %v316 = vunpack.c.l.b16 %v116
    %v317 = vunpack.c.l.b16 %v117
    %v318 = vunpack.c.l.b16 %v118
    %v319 = vunpack.c.l.b16 %v119
    %v320 = vunpack.c.l.b16 %v120
    %v321 = vunpack.c.l.b16 %v121
    %v322 = vunpack.c.l.b16 %v122
    %v323 = vunpack.c.l.b16 %v123
    %v324 = vunpack.c.l.b16 %v124
    %v325 = vunpack.c.l.b16 %v125
    %v326 = vunpack.c.l.b16 %v126
    %v327 = vunpack.c.l.b16 %v127
    %v328 = vunpack.c.l.b16 %v128
    %v329 = vunpack.c.l.b16 %v129
    %v330 = vunpack.c.l.b16 %v130
    %v331 = vunpack.c.l.b16 %v131
    %v332 = vunpack.c.l.b16 %v132
    %v333 = vunpack.c.l.b16 %v133
    %v334 = vunpack.c.l.b16 %v134
    %v335 = vunpack.c.l.b16 %v135
    %v336 = vunpack.c.l.b16 %v136
    %v337 = vunpack.c.l.b16 %v137
    %v338 = vunpack.c.l.b16 %v138
    %v339 = vunpack.c.l.b16 %v139
    %v340 = vunpack.c.l.b16 %v140
    %v341 = vunpack.c.l.b16 %v141
    %v342 = vunpack.c.l.b16 %v142
    %v343 = vunpack.c.l.b16 %v143
    %v344 = vunpack.c.l.b16 %v144
    %v345 = vunpack.c.l.b16 %v145
    %v346 = vunpack.c.l.b16 %v146
    %v347 = vunpack.c.l.b16 %v147
    %v348 = vunpack.c.l.b16 %v148
    %v349 = vunpack.c.l.b16 %v149
    %v350 = vunpack.c.l.b16 %v150
    %v351 = vunpack.c.l.b16 %v151
    %v352 = vunpack.c.l.b16 %v152
    %v353 = vunpack.c.l.b16 %v153
    %v354 = vunpack.c.l.b16 %v154
    %v355 = vunpack.c.l.b16 %v155
    %v356 = vunpack.c.l.b16 %v156
    %v357 = vunpack.c.l.b16 %v157
    %v358 = vunpack.c.l.b16 %v158
    %v359 = vunpack.c.l.b16 %v159
    %v360 = vunpack.c.l.b16 %v160
    %v361 = vunpack.c.l.b16 %v161
    %v362 = vunpack.c.l.b16 %v162
    %v363 = vunpack.c.l.b16 %v163
    %v364 = vunpack.c.l.b16 %v164
    %v365 = vunpack.c.l.b16 %v165
    %v366 = vunpack.c.l.b16 %v166
    %v367 = vunpack.c.l.b16 %v167
    %v368 = vunpack.c.l.b16 %v168
    %v369 = vunpack.c.l.b16 %v169
    %v370 = vunpack.c.l.b16 %v170
    %v371 = vunpack.c.l.b16 %v171
    %v372 = vunpack.c.l.b16 %v172
    %v373 = vunpack.c.l.b16 %v173
    %v374 = vunpack.c.l.b16 %v174
    %v375 = vunpack.c.l.b16 %v175
    %v376 = vunpack.c.l.b16 %v176
    %v377 = vunpack.c.l.b16 %v177
    %v378 = vunpack.c.l.b16 %v178
    %v379 = vpack.c.b16 %v282, %v281
    %v380 = vpack.c.b16 %v284, %v283
    %v381 = vpack.c.b16 %v286, %v285
    %v382 = vpack.c.b16 %v288, %v287
    %v383 = vpack.c.b16 %v290, %v289
    %v384 = vpack.c.b16 %v292, %v291
    %v385 = vpack.c.b16 %v294, %v293
    %v386 = vpack.c.b16 %v296, %v295
    %v387 = vpack.c.b16 %v298, %v297
    %v388 = vpack.c.b16 %v300, %v299
    %v389 = vpack.c.b16 %v302, %v301
    %v390 = vpack.c.b16 %v304, %v303
    %v391 = vpack.c.b16 %v306, %v305
    %v392 = vpack.c.b16 %v308, %v307
    %v393 = vpack.c.b16 %v310, %v309
    %v394 = vpack.c.b16 %v312, %v311
    %v395 = vpack.c.b16 %v314, %v313
    %v396 = vpack.c.b16 %v316, %v315
    %v397 = vpack.c.b16 %v318, %v317
    %v398 = vpack.c.b16 %v320, %v319
    %v399 = vpack.c.b16 %v322, %v321
    %v400 = vpack.c.b16 %v324, %v323
    %v401 = vpack.c.b16 %v326, %v325
    %v402 = vpack.c.b16 %v328, %v327
    %v403 = vpack.c.b16 %v330, %v329
    %v404 = vpack.c.b16 %v332, %v331
    %v405 = vpack.c.b16 %v334, %v333
    %v406 = vpack.c.b16 %v336, %v335
    %v407 = vpack.c.b16 %v338, %v337
    %v408 = vpack.c.b16 %v340, %v339
    %v409 = vpack.c.b16 %v342, %v341
    %v410 = vpack.c.b16 %v344, %v343
    %v411 = vpack.c.b16 %v346, %v345
    %v412 = vpack.c.b16 %v348, %v347
    %v413 = vpack.c.b16 %v350, %v349
    %v414 = vpack.c.b16 %v352, %v351
    %v415 = vpack.c.b16 %v354, %v353
    %v416 = vpack.c.b16 %v356, %v355
    %v417 = vpack.c.b16 %v358, %v357
    %v418 = vpack.c.b16 %v360, %v359
    %v419 = vpack.c.b16 %v362, %v361
    %v420 = vpack.c.b16 %v364, %v363
    %v421 = vpack.c.b16 %v366, %v365
    %v422 = vpack.c.b16 %v368, %v367
    %v423 = vpack.c.b16 %v370, %v369
    %v424 = vpack.c.b16 %v372, %v371
    %v425 = vpack.c.b16 %v374, %v373
    %v426 = vpack.c.b16 %v376, %v375
    %v427 = vpack.c.b16 %v378, %v377
    %vm477 = vcmask 130048
    %v479 = vsel %vm477, %v80, 0
    %481 = vmatpush.bf16.msra.mxu0 %v386
    %482 = vmatpush.bf16.msra.mxu0 %v385
    %483 = vmatpush.bf16.msra.mxu0 %v384
    %484 = vmatpush.bf16.msra.mxu0 %v383
    %485 = vmatpush.bf16.msra.mxu0 %v382
    %486 = vmatpush.bf16.msra.mxu0 %v381
    %487 = vmatpush.bf16.msra.mxu0 %v380
    %488 = vmatpush.bf16.msra.mxu0 %v379
    %489 = vmatmul.bf16.gmra.mxu0 %v74
    %v490 = vpop.f32.mrf.mxu0
    %v491 = vadd.f32 %v181, %v490
    %v492 = vpop.f32.mrf.mxu0
    %493 = vdwg.mxu0
    %494 = vmatpush.bf16.msra.mxu0 %v394
    %495 = vmatpush.bf16.msra.mxu0 %v393
    %496 = vmatpush.bf16.msra.mxu0 %v392
    %497 = vmatpush.bf16.msra.mxu0 %v391
    %498 = vmatpush.bf16.msra.mxu0 %v390
    %499 = vmatpush.bf16.msra.mxu0 %v389
    %500 = vmatpush.bf16.msra.mxu0 %v388
    %501 = vmatpush.bf16.msra.mxu0 %v387
    %502 = vmatmul.bf16.gmra.mxu0 %v75
    %v503 = vpop.f32.mrf.mxu0
    %v504 = vadd.f32 %v491, %v503
    %v505 = vpop.f32.mrf.mxu0
    %506 = vdwg.mxu0
    %507 = vmatpush.bf16.msra.mxu0 %v402
    %508 = vmatpush.bf16.msra.mxu0 %v401
    %509 = vmatpush.bf16.msra.mxu0 %v400
    %510 = vmatpush.bf16.msra.mxu0 %v399
    %511 = vmatpush.bf16.msra.mxu0 %v398
    %512 = vmatpush.bf16.msra.mxu0 %v397
    %513 = vmatpush.bf16.msra.mxu0 %v396
    %514 = vmatpush.bf16.msra.mxu0 %v395
    %515 = vmatmul.bf16.gmra.mxu0 %v76
    %v516 = vpop.f32.mrf.mxu0
    %v517 = vadd.f32 %v504, %v516
    %v518 = vpop.f32.mrf.mxu0
    %519 = vdwg.mxu0
    %520 = vmatpush.bf16.msra.mxu0 %v410
    %521 = vmatpush.bf16.msra.mxu0 %v409
    %522 = vmatpush.bf16.msra.mxu0 %v408
    %523 = vmatpush.bf16.msra.mxu0 %v407
    %524 = vmatpush.bf16.msra.mxu0 %v406
    %525 = vmatpush.bf16.msra.mxu0 %v405
    %526 = vmatpush.bf16.msra.mxu0 %v404
    %527 = vmatpush.bf16.msra.mxu0 %v403
    %528 = vmatmul.bf16.gmra.mxu0 %v77
    %v529 = vpop.f32.mrf.mxu0
    %v530 = vadd.f32 %v517, %v529
    %v531 = vpop.f32.mrf.mxu0
    %532 = vdwg.mxu0
    %533 = vmatpush.bf16.msra.mxu0 %v418
    %534 = vmatpush.bf16.msra.mxu0 %v417
    %535 = vmatpush.bf16.msra.mxu0 %v416
    %536 = vmatpush.bf16.msra.mxu0 %v415
    %537 = vmatpush.bf16.msra.mxu0 %v414
    %538 = vmatpush.bf16.msra.mxu0 %v413
    %539 = vmatpush.bf16.msra.mxu0 %v412
    %540 = vmatpush.bf16.msra.mxu0 %v411
    %541 = vmatmul.bf16.gmra.mxu0 %v78
    %v542 = vpop.f32.mrf.mxu0
    %v543 = vadd.f32 %v530, %v542
    %v544 = vpop.f32.mrf.mxu0
    %545 = vdwg.mxu0
    %546 = vmatpush.bf16.msra.mxu0 %v426
    %547 = vmatpush.bf16.msra.mxu0 %v425
    %548 = vmatpush.bf16.msra.mxu0 %v424
    %549 = vmatpush.bf16.msra.mxu0 %v423
    %550 = vmatpush.bf16.msra.mxu0 %v422
    %551 = vmatpush.bf16.msra.mxu0 %v421
    %552 = vmatpush.bf16.msra.mxu0 %v420
    %553 = vmatpush.bf16.msra.mxu0 %v419
    %554 = vmatmul.bf16.gmra.mxu0 %v79
    %v555 = vpop.f32.mrf.mxu0
    %v556 = vadd.f32 %v543, %v555
    %v557 = vpop.f32.mrf.mxu0
    %558 = vdwg.mxu0
    %559 = vmatpush.bf16.msra.mxu0 0
    %560 = vmatpush.bf16.msra.mxu0 0
    %561 = vmatpush.bf16.msra.mxu0 0
    %562 = vmatpush.bf16.msra.mxu0 0
    %563 = vmatpush.bf16.msra.mxu0 0
    %564 = vmatpush.bf16.msra.mxu0 0
    %565 = vmatpush.bf16.msra.mxu0 0
    %566 = vmatpush.bf16.msra.mxu0 %v427
    %567 = vmatmul.bf16.gmra.mxu0 %v479
    %v568 = vpop.f32.mrf.mxu0
    %v569 = vadd.f32 %v556, %v568
    %v570 = vpop.f32.mrf.mxu0
    %571 = vdwg.mxu0
    %v572 = vmax.f32 %v569, 0.0
    %v573 = vpack.c.bf16 %v572, %v572
    %v574 = vld [vmem:[#allocation7] sm:$0xf]
    %v575 = vld [vmem:[#allocation7 + $0x4] sm:$0xf]
    %v576 = vld [vmem:[#allocation7 + $0x8] sm:$0xf]
    %v577 = vld [vmem:[#allocation7 + $0xc] sm:$0xf]
    %v578 = vld [vmem:[#allocation7 + $0x10] sm:$0xf]
    %v579 = vld [vmem:[#allocation7 + $0x14] sm:$0xf]
    %v580 = vld [vmem:[#allocation7 + $0x18] sm:$0xf]
    %v581 = vld [vmem:[#allocation7 + $0x1c] sm:$0xf]
    %v582 = vld [vmem:[#allocation7 + $0x20] sm:$0xf]
    %v583 = vld [vmem:[#allocation7 + $0x24] sm:$0xf]
    %v584 = vld [vmem:[#allocation7 + $0x28] sm:$0xf]
    %v585 = vld [vmem:[#allocation7 + $0x2c] sm:$0xf]
    %v586 = vld [vmem:[#allocation7 + $0x30] sm:$0xf]
    %v587 = vld [vmem:[#allocation7 + $0x34] sm:$0xf]
    %v588 = vld [vmem:[#allocation7 + $0x38] sm:$0xf]
    %v589 = vld [vmem:[#allocation7 + $0x3c] sm:$0xf]
    %v590 = vld [vmem:[%s4] sm:$0x1]
    %v592 = vperm.slane %v590, 0
    %v610 = vunpack.c.l.b16 %v574
    %v611 = vunpack.c.l.b16 %v575
    %v612 = vunpack.c.l.b16 %v576
    %v613 = vunpack.c.l.b16 %v577
    %v614 = vunpack.c.l.b16 %v578
    %v615 = vunpack.c.l.b16 %v579
    %v616 = vunpack.c.l.b16 %v580
    %v617 = vunpack.c.l.b16 %v581
    %v618 = vunpack.c.l.b16 %v582
    %v619 = vunpack.c.l.b16 %v583
    %v620 = vunpack.c.l.b16 %v584
    %v621 = vunpack.c.l.b16 %v585
    %v622 = vunpack.c.l.b16 %v586
    %v623 = vunpack.c.l.b16 %v587
    %v624 = vunpack.c.l.b16 %v588
    %v625 = vunpack.c.l.b16 %v589
    %v626 = vpack.c.b16 %v611, %v610
    %v627 = vpack.c.b16 %v613, %v612
    %v628 = vpack.c.b16 %v615, %v614
    %v629 = vpack.c.b16 %v617, %v616
    %v630 = vpack.c.b16 %v619, %v618
    %v631 = vpack.c.b16 %v621, %v620
    %v632 = vpack.c.b16 %v623, %v622
    %v633 = vpack.c.b16 %v625, %v624
    %642 = vmatpush.bf16.msra.mxu0 %v633
    %643 = vmatpush.bf16.msra.mxu0 %v632
    %644 = vmatpush.bf16.msra.mxu0 %v631
    %645 = vmatpush.bf16.msra.mxu0 %v630
    %646 = vmatpush.bf16.msra.mxu0 %v629
    %647 = vmatpush.bf16.msra.mxu0 %v628
    %648 = vmatpush.bf16.msra.mxu0 %v627
    %649 = vmatpush.bf16.msra.mxu0 %v626
    %650 = vmatmul.bf16.gmra.mxu0 %v573
    %v651 = vpop.f32.mrf.mxu0
    %v652 = vadd.f32 %v592, %v651
    %v653 = vpop.f32.mrf.mxu0
    %654 = vdwg.mxu0
    %v655 = vpack.c.bf16 %v652, %v652
    %656 = vst [vmem:[#allocation8] sm:$0xf] %v655
    // Predicated region
    $region34: #{tpu_custom_call.1} parent=1 // pred_check
      _
    $region35: #{tpu_custom_call.1} parent=1 // pred_check_branch
      %658 = sbr.rel (0) target = $region37
    $region36: #{tpu_custom_call.1} parent=1 // pred_region
      %660 = vsyncadd [#allocation4], 0
      %s662 = sshll.u32 [#allocation8], 4
      %s663 = int_to_ptr.vmem [resolvable:$true] %s662
      %s664 = sshll.u32 %s5, 4
      %s665 = int_to_ptr.hbm [resolvable:$true] %s664
      %667 = dma.vmem_to_hbm [thread:$0]  %s663, 64, %s665, [#allocation4]
    $region37: #{tpu_custom_call.1} parent=1 // pred_fallthru
      _
    // Predicated region
    $region38: #{tpu_custom_call.1} parent=1 // pred_check
      _
    $region39: #{tpu_custom_call.1} parent=1 // pred_check_branch
      %669 = sbr.rel (0) target = $region41
    $region40: #{tpu_custom_call.1} parent=1 // pred_region
      %671 = dma.done [#allocation4], 64
    $region41: #{tpu_custom_call.1} parent=1 // pred_fallthru
      _
    %672 = vsyncpa [#allocation3], 1
    %673 = vsyncpa [#allocation6], 1
    %674 = vsyncpa [#allocation4], 1

</llo_original>
